<compile_context>
chip_gen: v7x
topology: tpu7x:2x2x1
jax: 0.10.0
libtpu: 0.0.40
codegen_flags: <defaults>
</compile_context>

<pallas_src>
import jax
import jax.numpy as jnp
from jax.experimental import pallas as pl
from jax.experimental.pallas import tpu as pltpu


def _round_up(x, m):
    return (x + m - 1) // m * m


# ---------------------------------------------------------------------------
# Kernels
# ---------------------------------------------------------------------------

def _mlp_kernel_batch_major(b3_ref, g_ref, t_ref, w1_ref, s1_ref, t1_ref,
                            w2_ref, s2_ref, t2_ref, w3_ref, o_ref):
    """Batch rows on sublanes, features on lanes (preferred on v5e).

    Layer 1 is a single merged K = gcn_dim+tfidf_dim matmul (in-kernel concat),
    BN is pre-folded to scale/shift, dropout is identity (eval), the output
    layer is a VPU multiply + lane reduction and b3 is added from SMEM.
    """
    cdt = w1_ref.dtype                       # matmul compute dtype (bf16)
    ept = s1_ref.dtype                       # epilogue dtype (f32 / bf16)

    # fc1: in-kernel concat of the two input halves -> one K=d_in dot.
    x = jnp.concatenate([g_ref[...].astype(cdt), t_ref[...].astype(cdt)],
                        axis=-1)                                      # (tb, d_in)
    h1 = jnp.dot(x, w1_ref[...], preferred_element_type=jnp.float32)  # (tb, H1p)
    # bn1 (folded) + relu; dropout -> identity (eval mode).
    h1 = jnp.maximum(h1.astype(ept) * s1_ref[...] + t1_ref[...], 0.0).astype(cdt)

    # fc2 + bn2 (folded) + relu; dropout -> identity.
    h2 = jnp.dot(h1, w2_ref[...], preferred_element_type=jnp.float32)  # (tb, H2p)
    h2 = jnp.maximum(h2.astype(ept) * s2_ref[...] + t2_ref[...], 0.0)

    # output layer: per-row lane reduction (f32) + b3; stored as full
    # (tb//128, 128) lane-dense blocks (no last-dim-1 masked store).
    out = jnp.sum(h2.astype(jnp.float32) * w3_ref[...], axis=-1) + b3_ref[0]
    o_ref[...] = out.reshape(o_ref.shape).astype(o_ref.dtype)


def _mlp_kernel_feature_major(b3_ref, xt_ref, w1t_ref, s1_ref, t1_ref,
                              w2t_ref, s2_ref, t2_ref, w3_ref, o_ref):
    """Feature-major: batch on the lane axis throughout (hᵀ = Wᵀ·xᵀ).

    Preferred on the 256-wide MXUs (v6e / v7x): M = hidden fills the sublane
    groups and N = tile fills both lane halves, cutting vmatmul issues
    ~2.5-3x vs. the batch-major form; the final sublane reduction lands
    directly in the lane-dense (1, tile) output row (no repack).
    """
    cdt = w1t_ref.dtype
    ept = s1_ref.dtype

    h1 = jnp.dot(w1t_ref[...], xt_ref[...],
                 preferred_element_type=jnp.float32)                  # (H1p, tb)
    h1 = jnp.maximum(h1.astype(ept) * s1_ref[...] + t1_ref[...], 0.0).astype(cdt)

    h2 = jnp.dot(w2t_ref[...], h1, preferred_element_type=jnp.float32)  # (H2p, tb)
    h2 = jnp.maximum(h2.astype(ept) * s2_ref[...] + t2_ref[...], 0.0)

    out = jnp.sum(h2.astype(jnp.float32) * w3_ref[...], axis=0) + b3_ref[0]
    o_ref[...] = out[None, :].astype(o_ref.dtype)                       # (1, tb)


# ---------------------------------------------------------------------------
# Wrapper
# ---------------------------------------------------------------------------

def _auto_config():
    """Pick layout / epilogue dtype from the local TPU generation."""
    kind = ""
    try:
        kind = jax.devices()[0].device_kind.lower()
    except Exception:
        pass
    newer = ("v6" in kind) or ("v7" in kind) or ("tpu7" in kind)
    layout = "feature_major" if newer else "batch_major"
    epilogue_dtype = jnp.bfloat16 if newer else jnp.float32  # v5e: no bf16 VPU
    return layout, epilogue_dtype


def _pick_tile(batch, max_tile):
    """Lane-aligned batch tile: <=127 rows of padding in the common case, and
    >=2 tiles whenever that costs no extra padding (dual-TC v7x)."""
    b128 = _round_up(max(batch, 1), 128)
    max_tile = max(_round_up(max_tile, 128), 128)
    if b128 > max_tile:
        n = -(-b128 // max_tile)
        tile = _round_up(-(-b128 // n), 128)       # balanced tiles
    elif b128 >= 512 and b128 % 256 == 0:
        tile = b128 // 2                           # 2 tiles, zero extra pad
    else:
        tile = b128
    n_tiles = -(-batch // tile)
    return tile, n_tiles, n_tiles * tile


def hybrid_recommender_forward(gcn_emb, tfidf_emb, params, *, tile_b=2048,
                               compute_dtype=jnp.bfloat16, layout=None,
                               epilogue_dtype=None):
    """JAX/Pallas equivalent of HybridRecommenderNN.forward (eval mode)."""
    auto_layout, auto_ep = _auto_config()
    layout = auto_layout if layout is None else layout
    epilogue_dtype = auto_ep if epilogue_dtype is None else epilogue_dtype

    B, gcn_dim = gcn_emb.shape
    tfidf_dim = tfidf_emb.shape[1]
    d_in = gcn_dim + tfidf_dim
    eps = 1e-5

    # Fold fc bias + BatchNorm (eval mode, running stats) into per-feature
    # scale/shift:  bn(fc(x)) = (x @ W) * scale + (b * scale + shift)
    def fold(b, gamma, beta, mean, var):
        scale = gamma / jnp.sqrt(var + eps)
        shift = beta - mean * scale
        return scale, b * scale + shift

    s1, t1 = fold(params["b1"], params["g1"], params["be1"],
                  params["m1"], params["v1"])
    s2, t2 = fold(params["b2"], params["g2"], params["be2"],
                  params["m2"], params["v2"])

    w1, w2, w3, b3 = params["w1"], params["w2"], params["w3"], params["b3"]
    H1, H2 = w1.shape[1], w2.shape[1]
    H1p, H2p = _round_up(H1, 128), _round_up(H2, 128)

    def pad2(a, rows, cols):
        return jnp.pad(a, ((0, rows - a.shape[0]), (0, cols - a.shape[1])))

    tile, n_tiles, B_pad = _pick_tile(B, tile_b)
    b3_smem = b3.reshape(1).astype(jnp.float32)      # SMEM scalar, read in-kernel

    ib = jnp.dtype(compute_dtype).itemsize
    cost = pl.CostEstimate(
        flops=2 * B_pad * (d_in * H1p + H1p * H2p + H2p),
        transcendentals=0,
        bytes_accessed=(B_pad * d_in * 4
                        + (d_in * H1p + H1p * H2p) * ib
                        + (2 * H1p + 2 * H2p + H2p) * 4
                        + B_pad * 4))
    cparams = pltpu.CompilerParams(dimension_semantics=("parallel",))

    if layout == "feature_major":
        # Batch on lanes.  Concat/cast/transpose of the small (B, d_in) input
        # happens once in the wrapper (one fused XLA op); padded rows are
        # sliced off below (they are NOT zero at the output).
        xt = jnp.concatenate([gcn_emb, tfidf_emb], axis=1).astype(compute_dtype).T
        if B_pad != B:
            xt = jnp.pad(xt, ((0, 0), (0, B_pad - B)))
        w1t = pad2(w1.T, H1p, d_in).astype(compute_dtype)          # (H1p, d_in)
        w2t = pad2(w2.T, H2p, H1p).astype(compute_dtype)           # (H2p, H1p)
        col = lambda v, n: jnp.pad(v, (0, n - v.shape[0])).reshape(n, 1)
        s1c = col(s1, H1p).astype(epilogue_dtype)
        t1c = col(t1, H1p).astype(epilogue_dtype)
        s2c = col(s2, H2p).astype(epilogue_dtype)
        t2c = col(t2, H2p).astype(epilogue_dtype)
        w3c = col(w3[:, 0], H2p).astype(jnp.float32)

        out = pl.pallas_call(
            _mlp_kernel_feature_major,
            out_shape=jax.ShapeDtypeStruct((1, B_pad), jnp.float32),
            grid_spec=pltpu.PrefetchScalarGridSpec(
                num_scalar_prefetch=0,
                grid=(n_tiles,),
                in_specs=[
                    pl.BlockSpec(memory_space=pltpu.MemorySpace.SMEM),  # b3
                    pl.BlockSpec((d_in, tile), lambda i: (0, i)),       # x^T tile
                    pl.BlockSpec((H1p, d_in), lambda i: (0, 0)),        # W1^T
                    pl.BlockSpec((H1p, 1), lambda i: (0, 0)),           # scale1
                    pl.BlockSpec((H1p, 1), lambda i: (0, 0)),           # shift1
                    pl.BlockSpec((H2p, H1p), lambda i: (0, 0)),         # W2^T
                    pl.BlockSpec((H2p, 1), lambda i: (0, 0)),           # scale2
                    pl.BlockSpec((H2p, 1), lambda i: (0, 0)),           # shift2
                    pl.BlockSpec((H2p, 1), lambda i: (0, 0)),           # w3 col
                ],
                out_specs=pl.BlockSpec((1, tile), lambda i: (0, i)),    # lane-dense
            ),
            compiler_params=cparams,
            cost_estimate=cost,
        )(b3_smem, xt, w1t, s1c, t1c, w2t, s2c, t2c, w3c)
        return out.reshape(-1)[:B]

    # ---- batch-major (preferred on v5e) ----
    g, t = gcn_emb, tfidf_emb
    if B_pad != B:
        # NOTE: padded rows are sliced off below; they are NOT zero at the
        # output (relu of the folded BN shift), so never consume the padded
        # buffer directly.
        g = jnp.pad(g, ((0, B_pad - B), (0, 0)))
        t = jnp.pad(t, ((0, B_pad - B), (0, 0)))

    w1p = pad2(w1, d_in, H1p).astype(compute_dtype)      # merged (d_in, H1p) W1
    w2p = pad2(w2, H1p, H2p).astype(compute_dtype)
    row = lambda v, n: jnp.pad(v, (0, n - v.shape[0])).reshape(1, n)
    s1r = row(s1, H1p).astype(epilogue_dtype)
    t1r = row(t1, H1p).astype(epilogue_dtype)
    s2r = row(s2, H2p).astype(epilogue_dtype)
    t2r = row(t2, H2p).astype(epilogue_dtype)
    w3r = row(w3[:, 0], H2p).astype(jnp.float32)

    tile128 = tile // 128
    out = pl.pallas_call(
        _mlp_kernel_batch_major,
        out_shape=jax.ShapeDtypeStruct((n_tiles, tile128, 128), jnp.float32),
        grid_spec=pltpu.PrefetchScalarGridSpec(
            num_scalar_prefetch=0,
            grid=(n_tiles,),
            in_specs=[
                pl.BlockSpec(memory_space=pltpu.MemorySpace.SMEM),   # b3
                pl.BlockSpec((tile, gcn_dim), lambda i: (i, 0)),     # gcn tile
                pl.BlockSpec((tile, tfidf_dim), lambda i: (i, 0)),   # tfidf tile
                pl.BlockSpec((d_in, H1p), lambda i: (0, 0)),         # W1 (merged)
                pl.BlockSpec((1, H1p), lambda i: (0, 0)),            # scale1
                pl.BlockSpec((1, H1p), lambda i: (0, 0)),            # shift1
                pl.BlockSpec((H1p, H2p), lambda i: (0, 0)),          # W2
                pl.BlockSpec((1, H2p), lambda i: (0, 0)),            # scale2
                pl.BlockSpec((1, H2p), lambda i: (0, 0)),            # shift2
                pl.BlockSpec((1, H2p), lambda i: (0, 0)),            # w3 row
            ],
            out_specs=pl.BlockSpec((1, tile128, 128), lambda i: (i, 0, 0)),
        ),
        compiler_params=cparams,
        cost_estimate=cost,
    )(b3_smem, g, t, w1p, s1r, t1r, w2p, s2r, t2r, w3r)
    return out.reshape(-1)[:B]


# ---------------------------------------------------------------------------
# Synthetic params + references
# ---------------------------------------------------------------------------

def init_params(key, gcn_dim, tfidf_dim, hidden_dims=(128, 64)):
    """Deterministic synthetic parameters matching HybridRecommenderNN shapes.

    Weights are stored (in_features, out_features) so forward is x @ W."""
    d_in = gcn_dim + tfidf_dim
    h1, h2 = hidden_dims
    ks = jax.random.split(key, 10)
    return {
        "w1": jax.random.normal(ks[0], (d_in, h1), jnp.float32) * 0.1,
        "b1": jax.random.normal(ks[1], (h1,), jnp.float32) * 0.1,
        "g1": 1.0 + 0.1 * jax.random.normal(ks[2], (h1,), jnp.float32),
        "be1": 0.1 * jax.random.normal(ks[3], (h1,), jnp.float32),
        "m1": 0.05 * jax.random.normal(ks[4], (h1,), jnp.float32),
        "v1": 1.0 + 0.1 * jnp.abs(jax.random.normal(ks[5], (h1,), jnp.float32)),
        "w2": jax.random.normal(ks[6], (h1, h2), jnp.float32) * 0.1,
        "b2": jax.random.normal(ks[7], (h2,), jnp.float32) * 0.1,
        "g2": jnp.ones((h2,), jnp.float32),
        "be2": jnp.zeros((h2,), jnp.float32),
        "m2": jnp.zeros((h2,), jnp.float32),
        "v2": jnp.ones((h2,), jnp.float32),
        "w3": jax.random.normal(ks[8], (h2, 1), jnp.float32) * 0.1,
        "b3": jax.random.normal(ks[9], (1,), jnp.float32) * 0.1,
    }


def _reference_forward_f32(gcn_emb, tfidf_emb, params):
    """Literal (PyTorch-equivalent) f32 reference: eval BN, dropout=identity."""
    eps = 1e-5
    x = jnp.concatenate([gcn_emb, tfidf_emb], axis=1)
    h = x @ params["w1"] + params["b1"]
    h = (h - params["m1"]) / jnp.sqrt(params["v1"] + eps) * params["g1"] + params["be1"]
    h = jnp.maximum(h, 0.0)
    h = h @ params["w2"] + params["b2"]
    h = (h - params["m2"]) / jnp.sqrt(params["v2"] + eps) * params["g2"] + params["be2"]
    h = jnp.maximum(h, 0.0)
    out = h @ params["w3"] + params["b3"]
    return out.squeeze()


def _reference_forward_emulated(gcn_emb, tfidf_emb, params,
                                compute_dtype, epilogue_dtype):
    """Reference that emulates the kernel's quantization (bf16 matmul inputs,
    f32 accumulation, bf16/f32 folded-BN+ReLU epilogue) for a tight check."""
    eps = 1e-5
    q = lambda a: a.astype(compute_dtype).astype(jnp.float32)
    qe = lambda a: a.astype(epilogue_dtype).astype(jnp.float32)

    def fold(b, g, be, m, v):
        s = g / jnp.sqrt(v + eps)
        return s, be - m * s + b * s

    s1, t1 = fold(params["b1"], params["g1"], params["be1"],
                  params["m1"], params["v1"])
    s2, t2 = fold(params["b2"], params["g2"], params["be2"],
                  params["m2"], params["v2"])
    x = jnp.concatenate([gcn_emb, tfidf_emb], axis=1)
    h = q(x) @ q(params["w1"])
    h = jnp.maximum(qe(qe(qe(h) * qe(s1)) + qe(t1)), 0.0)
    h = q(h) @ q(params["w2"])
    h = jnp.maximum(qe(qe(qe(h) * qe(s2)) + qe(t2)), 0.0)
    out = h @ params["w3"] + params["b3"]
    return out.squeeze()


if __name__ == "__main__":
    key = jax.random.PRNGKey(0)
    k_gcn, k_tfidf, k_params = jax.random.split(key, 3)

    batch = 16
    gcn_dim, tfidf_dim = 16, 16
    hidden_dims = (128, 64)

    gcn_emb = jax.random.normal(k_gcn, (batch, gcn_dim), jnp.float32)
    tfidf_emb = jax.random.normal(k_tfidf, (batch, tfidf_dim), jnp.float32)
    params = init_params(k_params, gcn_dim, tfidf_dim, hidden_dims)

    auto_layout, ep_dtype = _auto_config()
    other_layout = "batch_major" if auto_layout == "feature_major" else "feature_major"

    # Run the device-preferred layout and the alternate layout (both kernels
    # are exercised regardless of which TPU generation this runs on).
    out = jax.block_until_ready(
        hybrid_recommender_forward(gcn_emb, tfidf_emb, params))
    out_other = jax.block_until_ready(
        hybrid_recommender_forward(gcn_emb, tfidf_emb, params, layout=other_layout))
    assert out.shape == (batch,), out.shape
    assert out_other.shape == (batch,), out_other.shape

    # Tight check vs a reference that emulates the kernel's quantization.
    ref_q = _reference_forward_emulated(gcn_emb, tfidf_emb, params,
                                        compute_dtype=jnp.bfloat16,
                                        epilogue_dtype=ep_dtype)
    assert jnp.allclose(out, ref_q, atol=1e-2, rtol=1e-2), "mismatch vs emulated reference"
    assert jnp.allclose(out_other, ref_q, atol=1e-2, rtol=1e-2), "alt layout mismatch vs emulated reference"

    # Loose check vs the exact f32 (PyTorch-equivalent) reference.
    ref_f32 = _reference_forward_f32(gcn_emb, tfidf_emb, params)
    assert jnp.allclose(out, ref_f32, atol=5e-2, rtol=5e-2), "mismatch vs f32 reference"
    assert jnp.allclose(out_other, ref_f32, atol=5e-2, rtol=5e-2), "alt layout mismatch vs f32 reference"

    print("KERNEL_OK")
</pallas_src>

<mosaic_0001>
module attributes {stable_mosaic.version = 11 : i64} {
  func.func @_mlp_kernel_batch_major(%arg0: i32, %arg1: memref<1xf32, #tpu.memory_space<smem>>, %arg2: memref<128x16xf32, #tpu.memory_space<vmem>>, %arg3: memref<128x16xf32, #tpu.memory_space<vmem>>, %arg4: memref<32x128xbf16, #tpu.memory_space<vmem>>, %arg5: memref<1x128xf32, #tpu.memory_space<vmem>>, %arg6: memref<1x128xf32, #tpu.memory_space<vmem>>, %arg7: memref<128x128xbf16, #tpu.memory_space<vmem>>, %arg8: memref<1x128xf32, #tpu.memory_space<vmem>>, %arg9: memref<1x128xf32, #tpu.memory_space<vmem>>, %arg10: memref<1x128xf32, #tpu.memory_space<vmem>>, %arg11: memref<1x1x128xf32, #tpu.memory_space<vmem>>) attributes {dimension_semantics = [#tpu.dimension_semantics<parallel>], iteration_bounds = array<i64: 1>, scalar_prefetch = 0 : i64, scratch_operands = 0 : i64, tpu.core_type = #tpu.core_type<tc>, window_params = [{transform_indices = @transform_0, window_bounds = array<i64: 1>}, {transform_indices = @transform_1, window_bounds = array<i64: 128, 16>}, {transform_indices = @transform_2, window_bounds = array<i64: 128, 16>}, {pipeline_mode = #tpu.pipeline_mode<synchronous>, transform_indices = @transform_3, window_bounds = array<i64: 32, 128>}, {pipeline_mode = #tpu.pipeline_mode<synchronous>, transform_indices = @transform_4, window_bounds = array<i64: 1, 128>}, {pipeline_mode = #tpu.pipeline_mode<synchronous>, transform_indices = @transform_5, window_bounds = array<i64: 1, 128>}, {pipeline_mode = #tpu.pipeline_mode<synchronous>, transform_indices = @transform_6, window_bounds = array<i64: 128, 128>}, {pipeline_mode = #tpu.pipeline_mode<synchronous>, transform_indices = @transform_7, window_bounds = array<i64: 1, 128>}, {pipeline_mode = #tpu.pipeline_mode<synchronous>, transform_indices = @transform_8, window_bounds = array<i64: 1, 128>}, {pipeline_mode = #tpu.pipeline_mode<synchronous>, transform_indices = @transform_9, window_bounds = array<i64: 1, 128>}, {transform_indices = @transform_10, window_bounds = array<i64: 1, 1, 128>}]} {
    %c0 = arith.constant 0 : index
    %c0_0 = arith.constant 0 : index
    %0 = vector.load %arg2[%c0, %c0_0] : memref<128x16xf32, #tpu.memory_space<vmem>>, vector<128x16xf32>
    %1 = arith.truncf %0 : vector<128x16xf32> to vector<128x16xbf16>
    %c0_1 = arith.constant 0 : index
    %c0_2 = arith.constant 0 : index
    %2 = vector.load %arg3[%c0_1, %c0_2] : memref<128x16xf32, #tpu.memory_space<vmem>>, vector<128x16xf32>
    %3 = arith.truncf %2 : vector<128x16xf32> to vector<128x16xbf16>
    %4 = tpu.concatenate %1, %3 in 1 : vector<128x16xbf16>, vector<128x16xbf16> -> vector<128x32xbf16>
    %c0_3 = arith.constant 0 : index
    %c0_4 = arith.constant 0 : index
    %5 = vector.load %arg4[%c0_3, %c0_4] : memref<32x128xbf16, #tpu.memory_space<vmem>>, vector<32x128xbf16>
    %cst = arith.constant dense<0.000000e+00> : vector<128x128xf32>
    %6 = tpu.matmul %4, %5, %cst {dimension_numbers = #tpu.dot_dimension_numbers<[1], [0], [0], [1], [0, 0, 1, 1], [], []>} : vector<128x32xbf16>, vector<32x128xbf16>, vector<128x128xf32> -> vector<128x128xf32>
    %c0_5 = arith.constant 0 : index
    %c0_6 = arith.constant 0 : index
    %7 = vector.load %arg5[%c0_5, %c0_6] : memref<1x128xf32, #tpu.memory_space<vmem>>, vector<1x128xf32>
    %8 = vector.broadcast %7 : vector<1x128xf32> to vector<128x128xf32>
    %9 = arith.mulf %6, %8 : vector<128x128xf32>
    %c0_7 = arith.constant 0 : index
    %c0_8 = arith.constant 0 : index
    %10 = vector.load %arg6[%c0_7, %c0_8] : memref<1x128xf32, #tpu.memory_space<vmem>>, vector<1x128xf32>
    %11 = vector.broadcast %10 : vector<1x128xf32> to vector<128x128xf32>
    %12 = arith.addf %9, %11 : vector<128x128xf32>
    %cst_9 = arith.constant 0.000000e+00 : f32
    %13 = vector.broadcast %cst_9 : f32 to vector<128x128xf32>
    %14 = arith.maximumf %12, %13 : vector<128x128xf32>
    %15 = arith.truncf %14 : vector<128x128xf32> to vector<128x128xbf16>
    %c0_10 = arith.constant 0 : index
    %c0_11 = arith.constant 0 : index
    %16 = vector.load %arg7[%c0_10, %c0_11] : memref<128x128xbf16, #tpu.memory_space<vmem>>, vector<128x128xbf16>
    %cst_12 = arith.constant dense<0.000000e+00> : vector<128x128xf32>
    %17 = tpu.matmul %15, %16, %cst_12 {dimension_numbers = #tpu.dot_dimension_numbers<[1], [0], [0], [1], [0, 0, 1, 1], [], []>} : vector<128x128xbf16>, vector<128x128xbf16>, vector<128x128xf32> -> vector<128x128xf32>
    %c0_13 = arith.constant 0 : index
    %c0_14 = arith.constant 0 : index
    %18 = vector.load %arg8[%c0_13, %c0_14] : memref<1x128xf32, #tpu.memory_space<vmem>>, vector<1x128xf32>
    %19 = vector.broadcast %18 : vector<1x128xf32> to vector<128x128xf32>
    %20 = arith.mulf %17, %19 : vector<128x128xf32>
    %c0_15 = arith.constant 0 : index
    %c0_16 = arith.constant 0 : index
    %21 = vector.load %arg9[%c0_15, %c0_16] : memref<1x128xf32, #tpu.memory_space<vmem>>, vector<1x128xf32>
    %22 = vector.broadcast %21 : vector<1x128xf32> to vector<128x128xf32>
    %23 = arith.addf %20, %22 : vector<128x128xf32>
    %cst_17 = arith.constant 0.000000e+00 : f32
    %24 = vector.broadcast %cst_17 : f32 to vector<128x128xf32>
    %25 = arith.maximumf %23, %24 : vector<128x128xf32>
    %c0_18 = arith.constant 0 : index
    %c0_19 = arith.constant 0 : index
    %26 = vector.load %arg10[%c0_18, %c0_19] : memref<1x128xf32, #tpu.memory_space<vmem>>, vector<1x128xf32>
    %27 = vector.broadcast %26 : vector<1x128xf32> to vector<128x128xf32>
    %28 = arith.mulf %25, %27 : vector<128x128xf32>
    %cst_20 = arith.constant dense<0.000000e+00> : vector<128xf32>
    %29 = vector.multi_reduction <add>, %28, %cst_20 [1] : vector<128x128xf32> to vector<128xf32>
    %c0_21 = arith.constant 0 : index
    %30 = memref.load %arg1[%c0_21] : memref<1xf32, #tpu.memory_space<smem>>
    %31 = vector.broadcast %30 : f32 to vector<128xf32>
    %32 = arith.addf %29, %31 : vector<128xf32>
    %33 = vector.shape_cast %32 : vector<128xf32> to vector<1x1x128xf32>
    %c0_22 = arith.constant 0 : index
    %c0_23 = arith.constant 0 : index
    %c0_24 = arith.constant 0 : index
    %34 = vector.load %arg11[%c0_22, %c0_23, %c0_24] : memref<1x1x128xf32, #tpu.memory_space<vmem>>, vector<1x1x128xf32>
    tpu.vector_store %arg11[%c0_22, %c0_23, %c0_24], %33 {strides = array<i32>} : memref<1x1x128xf32, #tpu.memory_space<vmem>>, vector<1x1x128xf32>,
    return
  }
  func.func @transform_0(%arg0: i32) -> i32 {
    %c0_i32 = arith.constant 0 : i32
    %c0_i32_0 = arith.constant 0 : i32
    return %c0_i32 : i32
  }
  func.func @transform_1(%arg0: i32) -> (i32, i32) {
    %c0_i32 = arith.constant 0 : i32
    %c0_i32_0 = arith.constant 0 : i32
    return %arg0, %c0_i32 : i32, i32
  }
  func.func @transform_2(%arg0: i32) -> (i32, i32) {
    %c0_i32 = arith.constant 0 : i32
    %c0_i32_0 = arith.constant 0 : i32
    return %arg0, %c0_i32 : i32, i32
  }
  func.func @transform_3(%arg0: i32) -> (i32, i32) {
    %c0_i32 = arith.constant 0 : i32
    %c0_i32_0 = arith.constant 0 : i32
    %c0_i32_1 = arith.constant 0 : i32
    return %c0_i32, %c0_i32_0 : i32, i32
  }
  func.func @transform_4(%arg0: i32) -> (i32, i32) {
    %c0_i32 = arith.constant 0 : i32
    %c0_i32_0 = arith.constant 0 : i32
    %c0_i32_1 = arith.constant 0 : i32
    return %c0_i32, %c0_i32_0 : i32, i32
  }
  func.func @transform_5(%arg0: i32) -> (i32, i32) {
    %c0_i32 = arith.constant 0 : i32
    %c0_i32_0 = arith.constant 0 : i32
    %c0_i32_1 = arith.constant 0 : i32
    return %c0_i32, %c0_i32_0 : i32, i32
  }
  func.func @transform_6(%arg0: i32) -> (i32, i32) {
    %c0_i32 = arith.constant 0 : i32
    %c0_i32_0 = arith.constant 0 : i32
    %c0_i32_1 = arith.constant 0 : i32
    return %c0_i32, %c0_i32_0 : i32, i32
  }
  func.func @transform_7(%arg0: i32) -> (i32, i32) {
    %c0_i32 = arith.constant 0 : i32
    %c0_i32_0 = arith.constant 0 : i32
    %c0_i32_1 = arith.constant 0 : i32
    return %c0_i32, %c0_i32_0 : i32, i32
  }
  func.func @transform_8(%arg0: i32) -> (i32, i32) {
    %c0_i32 = arith.constant 0 : i32
    %c0_i32_0 = arith.constant 0 : i32
    %c0_i32_1 = arith.constant 0 : i32
    return %c0_i32, %c0_i32_0 : i32, i32
  }
  func.func @transform_9(%arg0: i32) -> (i32, i32) {
    %c0_i32 = arith.constant 0 : i32
    %c0_i32_0 = arith.constant 0 : i32
    %c0_i32_1 = arith.constant 0 : i32
    return %c0_i32, %c0_i32_0 : i32, i32
  }
  func.func @transform_10(%arg0: i32) -> (i32, i32, i32) {
    %c0_i32 = arith.constant 0 : i32
    %c0_i32_0 = arith.constant 0 : i32
    %c0_i32_1 = arith.constant 0 : i32
    return %arg0, %c0_i32, %c0_i32_0 : i32, i32, i32
  }
}

</mosaic_0001>

<llo_original>
// kernel: tpu_custom_call.1
$region0: #{tpu_custom_call.1}
  #allocation0 [shape = 'u32[]', space=smem, size = 0x4, offset = 0x4, fixed_abs, tag = 'smem constant byte address 0x4 - core index']
  #allocation1 [shape = 'u32[144,128]{1,0:T(1,128)}', space=vmem, size = 0x12000, scoped, tag = 'internal scratch']
  #allocation2 [shape = 'f32[1]{0:T(128)S(6)}', space=smem, size = 0x200, scoped, tag = 'scoped memory for tpu_custom_call.1']
  %s0 = inlined_call_operand.<no memory space> [shape: f32[1], index: 0, kind: input, shape index: {}]
  %s1 = inlined_call_operand.vmem [shape: f32[128,16], index: 1, kind: input, shape index: {}]
  %s2 = inlined_call_operand.vmem [shape: f32[128,16], index: 2, kind: input, shape index: {}]
  %s3 = inlined_call_operand.vmem [shape: bf16[32,128], index: 3, kind: input, shape index: {}]
  %s4 = inlined_call_operand.vmem [shape: f32[1,128], index: 4, kind: input, shape index: {}]
  %s5 = inlined_call_operand.vmem [shape: f32[1,128], index: 5, kind: input, shape index: {}]
  %s6 = inlined_call_operand.vmem [shape: bf16[128,128], index: 6, kind: input, shape index: {}]
  %s7 = inlined_call_operand.vmem [shape: f32[1,128], index: 7, kind: input, shape index: {}]
  %s8 = inlined_call_operand.vmem [shape: f32[1,128], index: 8, kind: input, shape index: {}]
  %s9 = inlined_call_operand.vmem [shape: f32[1,128], index: 9, kind: input, shape index: {}]
  %s10 = inlined_call_operand.hbm [shape: f32[1,1,128], index: 10, kind: output, shape index: {}]
  %s11 = sld [smem:[#allocation0]]
  $region50: #{tpu_custom_call.1} parent=0
    _
  %s13 = ssub.s32 1, %s11
  %s14 = scalar_select 0, %s13, %s11
  %15 = sst [smem:[#allocation2]] %s0
  $region1: #{tpu_custom_call.1} parent=0
    #allocation3 [shape = 'u8[512]{0}', space=vmem, size = 0x400, scoped, tag = 'output window, operand 0, single buffered']
    #allocation4 [shape = 's32[1]{0}', space=sflag, size = 0x4, scoped, tag = 'scoped memory for tpu_custom_call.1']
    %16 = vsyncpa [#allocation4], 0
    // Predicated region
    $region2: #{tpu_custom_call.1} parent=1 // pred_check
      _
    $region3: #{tpu_custom_call.1} parent=1 // pred_check_branch
      %18 = sbr.rel (0) target = $region5
    $region4: #{tpu_custom_call.1} parent=1 // pred_region
      _
    $region5: #{tpu_custom_call.1} parent=1 // pred_fallthru
      _
    // Predicated region
    $region6: #{tpu_custom_call.1} parent=1 // pred_check
      _
    $region7: #{tpu_custom_call.1} parent=1 // pred_check_branch
      %20 = sbr.rel (0) target = $region9
    $region8: #{tpu_custom_call.1} parent=1 // pred_region
      _
    $region9: #{tpu_custom_call.1} parent=1 // pred_fallthru
      _
    // Predicated region
    $region10: #{tpu_custom_call.1} parent=1 // pred_check
      _
    $region11: #{tpu_custom_call.1} parent=1 // pred_check_branch
      %22 = sbr.rel (0) target = $region13
    $region12: #{tpu_custom_call.1} parent=1 // pred_region
      _
    $region13: #{tpu_custom_call.1} parent=1 // pred_fallthru
      _
    // Predicated region
    $region14: #{tpu_custom_call.1} parent=1 // pred_check
      _
    $region15: #{tpu_custom_call.1} parent=1 // pred_check_branch
      %24 = sbr.rel (0) target = $region17
    $region16: #{tpu_custom_call.1} parent=1 // pred_region
      _
    $region17: #{tpu_custom_call.1} parent=1 // pred_fallthru
      _
    // Predicated region
    $region18: #{tpu_custom_call.1} parent=1 // pred_check
      _
    $region19: #{tpu_custom_call.1} parent=1 // pred_check_branch
      %26 = sbr.rel (0) target = $region21
    $region20: #{tpu_custom_call.1} parent=1 // pred_region
      _
    $region21: #{tpu_custom_call.1} parent=1 // pred_fallthru
      _
    // Predicated region
    $region22: #{tpu_custom_call.1} parent=1 // pred_check
      _
    $region23: #{tpu_custom_call.1} parent=1 // pred_check_branch
      %28 = sbr.rel (0) target = $region25
    $region24: #{tpu_custom_call.1} parent=1 // pred_region
      _
    $region25: #{tpu_custom_call.1} parent=1 // pred_fallthru
      _
    // Predicated region
    $region26: #{tpu_custom_call.1} parent=1 // pred_check
      _
    $region27: #{tpu_custom_call.1} parent=1 // pred_check_branch
      %30 = sbr.rel (0) target = $region29
    $region28: #{tpu_custom_call.1} parent=1 // pred_region
      _
    $region29: #{tpu_custom_call.1} parent=1 // pred_fallthru
      _
    // Predicated region
    $region30: #{tpu_custom_call.1} parent=1 // pred_check
      _
    $region31: #{tpu_custom_call.1} parent=1 // pred_check_branch
      %32 = sbr.rel (0) target = $region33
    $region32: #{tpu_custom_call.1} parent=1 // pred_region
      _
    $region33: #{tpu_custom_call.1} parent=1 // pred_fallthru
      _
    // Predicated region
    $region34: #{tpu_custom_call.1} parent=1 // pred_check
      _
    $region35: #{tpu_custom_call.1} parent=1 // pred_check_branch
      %34 = sbr.rel (0) target = $region37
    $region36: #{tpu_custom_call.1} parent=1 // pred_region
      _
    $region37: #{tpu_custom_call.1} parent=1 // pred_fallthru
      _
    // Predicated region
    $region38: #{tpu_custom_call.1} parent=1 // pred_check
      _
    $region39: #{tpu_custom_call.1} parent=1 // pred_check_branch
      %36 = sbr.rel (0) target = $region41
    $region40: #{tpu_custom_call.1} parent=1 // pred_region
      _
    $region41: #{tpu_custom_call.1} parent=1 // pred_fallthru
      _
    %v38 = vld [vmem:[%s1] sm:$0xff]
    %v39 = vld [vmem:[%s1 + $0x8] sm:$0xff]
    %v40 = vld [vmem:[%s1 + $0x10] sm:$0xff]
    %v41 = vld [vmem:[%s1 + $0x18] sm:$0xff]
    %v42 = vld [vmem:[%s1 + $0x20] sm:$0xff]
    %v43 = vld [vmem:[%s1 + $0x28] sm:$0xff]
    %v44 = vld [vmem:[%s1 + $0x30] sm:$0xff]
    %v45 = vld [vmem:[%s1 + $0x38] sm:$0xff]
    %v46 = vld [vmem:[%s1 + $0x40] sm:$0xff]
    %v47 = vld [vmem:[%s1 + $0x48] sm:$0xff]
    %v48 = vld [vmem:[%s1 + $0x50] sm:$0xff]
    %v49 = vld [vmem:[%s1 + $0x58] sm:$0xff]
    %v50 = vld [vmem:[%s1 + $0x60] sm:$0xff]
    %v51 = vld [vmem:[%s1 + $0x68] sm:$0xff]
    %v52 = vld [vmem:[%s1 + $0x70] sm:$0xff]
    %v53 = vld [vmem:[%s1 + $0x78] sm:$0xff]
    %v54 = vpack.c.bf16 %v39, %v38
    %v55 = vpack.c.bf16 %v41, %v40
    %v56 = vpack.c.bf16 %v43, %v42
    %v57 = vpack.c.bf16 %v45, %v44
    %v58 = vpack.c.bf16 %v47, %v46
    %v59 = vpack.c.bf16 %v49, %v48
    %v60 = vpack.c.bf16 %v51, %v50
    %v61 = vpack.c.bf16 %v53, %v52
    %v62 = vld [vmem:[%s2] sm:$0xff]
    %v63 = vld [vmem:[%s2 + $0x8] sm:$0xff]
    %v64 = vld [vmem:[%s2 + $0x10] sm:$0xff]
    %v65 = vld [vmem:[%s2 + $0x18] sm:$0xff]
    %v66 = vld [vmem:[%s2 + $0x20] sm:$0xff]
    %v67 = vld [vmem:[%s2 + $0x28] sm:$0xff]
    %v68 = vld [vmem:[%s2 + $0x30] sm:$0xff]
    %v69 = vld [vmem:[%s2 + $0x38] sm:$0xff]
    %v70 = vld [vmem:[%s2 + $0x40] sm:$0xff]
    %v71 = vld [vmem:[%s2 + $0x48] sm:$0xff]
    %v72 = vld [vmem:[%s2 + $0x50] sm:$0xff]
    %v73 = vld [vmem:[%s2 + $0x58] sm:$0xff]
    %v74 = vld [vmem:[%s2 + $0x60] sm:$0xff]
    %v75 = vld [vmem:[%s2 + $0x68] sm:$0xff]
    %v76 = vld [vmem:[%s2 + $0x70] sm:$0xff]
    %v77 = vld [vmem:[%s2 + $0x78] sm:$0xff]
    %v78 = vpack.c.bf16 %v63, %v62
    %v79 = vpack.c.bf16 %v65, %v64
    %v80 = vpack.c.bf16 %v67, %v66
    %v81 = vpack.c.bf16 %v69, %v68
    %v82 = vpack.c.bf16 %v71, %v70
    %v83 = vpack.c.bf16 %v73, %v72
    %v84 = vpack.c.bf16 %v75, %v74
    %v85 = vpack.c.bf16 %v77, %v76
    %94 = vrot.lane.b32.xlu0 %v78, 16
    %v95 = vpop.permute.xlu0 %94
    %96 = vrot.lane.b32.xlu0 %v79, 16
    %v97 = vpop.permute.xlu0 %96
    %98 = vrot.lane.b32.xlu0 %v80, 16
    %v99 = vpop.permute.xlu0 %98
    %100 = vrot.lane.b32.xlu0 %v81, 16
    %v101 = vpop.permute.xlu0 %100
    %102 = vrot.lane.b32.xlu0 %v82, 16
    %v103 = vpop.permute.xlu0 %102
    %104 = vrot.lane.b32.xlu0 %v83, 16
    %v105 = vpop.permute.xlu0 %104
    %106 = vrot.lane.b32.xlu0 %v84, 16
    %v107 = vpop.permute.xlu0 %106
    %108 = vrot.lane.b32.xlu0 %v85, 16
    %v109 = vpop.permute.xlu0 %108
    %vm110 = vcmask 130048
    %v113 = vsel %vm110, %v54, %v95
    %v116 = vsel %vm110, %v55, %v97
    %v119 = vsel %vm110, %v56, %v99
    %v122 = vsel %vm110, %v57, %v101
    %v125 = vsel %vm110, %v58, %v103
    %v128 = vsel %vm110, %v59, %v105
    %v131 = vsel %vm110, %v60, %v107
    %v134 = vsel %vm110, %v61, %v109
    %v135 = vld [vmem:[%s3] sm:$0xf]
    %v136 = vld [vmem:[%s3 + $0x4] sm:$0xf]
    %v137 = vld [vmem:[%s3 + $0x8] sm:$0xf]
    %v138 = vld [vmem:[%s3 + $0xc] sm:$0xf]
    %v143 = vunpack.c.l.b16 %v135
    %v144 = vunpack.c.l.b16 %v136
    %v145 = vunpack.c.l.b16 %v137
    %v146 = vunpack.c.l.b16 %v138
    %v147 = vpack.c.b16 %v144, %v143
    %v148 = vpack.c.b16 %v146, %v145
    %vm151 = vcmask 261120
    %v152 = vsel %vm151, %v113, 0
    %v154 = vsel %vm151, %v116, 0
    %v156 = vsel %vm151, %v119, 0
    %v158 = vsel %vm151, %v122, 0
    %v160 = vsel %vm151, %v125, 0
    %v162 = vsel %vm151, %v128, 0
    %v164 = vsel %vm151, %v131, 0
    %v166 = vsel %vm151, %v134, 0
    %168 = vmatprep.subr.bf16.mxu0 0
    %169 = vmatpush1.bf16.msra.mxu0 %v147
    %170 = vmatprep.subr.bf16.mxu0 0
    %171 = vmatpush1.bf16.msra.mxu0 %v148
    %172 = vmatprep.subr.bf16.mxu0 0
    %173 = vmatpush1.bf16.msra.mxu0 0
    %174 = vmatprep.subr.bf16.mxu0 0
    %175 = vmatpush1.bf16.msra.mxu0 0
    %176 = vmatprep.subr.bf16.mxu0 0
    %177 = vmatpush1.bf16.msra.mxu0 0
    %178 = vmatprep.subr.bf16.mxu0 0
    %179 = vmatpush1.bf16.msra.mxu0 0
    %180 = vmatprep.subr.bf16.mxu0 0
    %181 = vmatpush1.bf16.msra.mxu0 0
    %182 = vmatprep.subr.bf16.mxu0 0
    %183 = vmatpush1.bf16.msra.mxu0 0
    %184 = vmatprep.subr.bf16.mxu0 0
    %185 = vmatpush1.bf16.msra.mxu0 0
    %186 = vmatprep.subr.bf16.mxu0 0
    %187 = vmatpush1.bf16.msra.mxu0 0
    %188 = vmatprep.subr.bf16.mxu0 0
    %189 = vmatpush1.bf16.msra.mxu0 0
    %190 = vmatprep.subr.bf16.mxu0 0
    %191 = vmatpush1.bf16.msra.mxu0 0
    %192 = vmatprep.subr.bf16.mxu0 0
    %193 = vmatpush1.bf16.msra.mxu0 0
    %194 = vmatprep.subr.bf16.mxu0 0
    %195 = vmatpush1.bf16.msra.mxu0 0
    %196 = vmatprep.subr.bf16.mxu0 0
    %197 = vmatpush1.bf16.msra.mxu0 0
    %198 = vmatprep.subr.bf16.mxu0 0
    %199 = vmatpush1.bf16.msra.mxu0 0
    %200 = vmatprep.mubr.bf16.mxu0 0
    %201 = vmatmul.mubr.bf16.gmra.mrb[0].mxu0 %v152
    %v202 = vpop.f32.mrb[0].mxu0
    %v203 = vadd.f32 0.0, %v202
    %v204 = vpop.f32.mrb[0].mxu0
    %v205 = vpop.f32.mrb[0].mxu0
    %v206 = vadd.f32 0.0, %v205
    %v207 = vpop.f32.mrb[0].mxu0
    %208 = vmatprep.mubr.bf16.mxu0 0
    %209 = vmatmul.mubr.bf16.gmra.mrb[0].mxu0 %v154
    %v210 = vpop.f32.mrb[0].mxu0
    %v211 = vadd.f32 0.0, %v210
    %v212 = vpop.f32.mrb[0].mxu0
    %v213 = vpop.f32.mrb[0].mxu0
    %v214 = vadd.f32 0.0, %v213
    %v215 = vpop.f32.mrb[0].mxu0
    %216 = vmatprep.mubr.bf16.mxu0 0
    %217 = vmatmul.mubr.bf16.gmra.mrb[0].mxu0 %v156
    %v218 = vpop.f32.mrb[0].mxu0
    %v219 = vadd.f32 0.0, %v218
    %v220 = vpop.f32.mrb[0].mxu0
    %v221 = vpop.f32.mrb[0].mxu0
    %v222 = vadd.f32 0.0, %v221
    %v223 = vpop.f32.mrb[0].mxu0
    %224 = vmatprep.mubr.bf16.mxu0 0
    %225 = vmatmul.mubr.bf16.gmra.mrb[0].mxu0 %v158
    %v226 = vpop.f32.mrb[0].mxu0
    %v227 = vadd.f32 0.0, %v226
    %v228 = vpop.f32.mrb[0].mxu0
    %v229 = vpop.f32.mrb[0].mxu0
    %v230 = vadd.f32 0.0, %v229
    %v231 = vpop.f32.mrb[0].mxu0
    %232 = vmatprep.mubr.bf16.mxu0 0
    %233 = vmatmul.mubr.bf16.gmra.mrb[0].mxu0 %v160
    %v234 = vpop.f32.mrb[0].mxu0
    %v235 = vadd.f32 0.0, %v234
    %v236 = vpop.f32.mrb[0].mxu0
    %v237 = vpop.f32.mrb[0].mxu0
    %v238 = vadd.f32 0.0, %v237
    %v239 = vpop.f32.mrb[0].mxu0
    %240 = vmatprep.mubr.bf16.mxu0 0
    %241 = vmatmul.mubr.bf16.gmra.mrb[0].mxu0 %v162
    %v242 = vpop.f32.mrb[0].mxu0
    %v243 = vadd.f32 0.0, %v242
    %v244 = vpop.f32.mrb[0].mxu0
    %v245 = vpop.f32.mrb[0].mxu0
    %v246 = vadd.f32 0.0, %v245
    %v247 = vpop.f32.mrb[0].mxu0
    %248 = vmatprep.mubr.bf16.mxu0 0
    %249 = vmatmul.mubr.bf16.gmra.mrb[0].mxu0 %v164
    %v250 = vpop.f32.mrb[0].mxu0
    %v251 = vadd.f32 0.0, %v250
    %v252 = vpop.f32.mrb[0].mxu0
    %v253 = vpop.f32.mrb[0].mxu0
    %v254 = vadd.f32 0.0, %v253
    %v255 = vpop.f32.mrb[0].mxu0
    %256 = vmatprep.mubr.bf16.mxu0 0
    %257 = vmatmul.mubr.bf16.gmra.mrb[0].mxu0 %v166
    %v258 = vpop.f32.mrb[0].mxu0
    %v259 = vadd.f32 0.0, %v258
    %v260 = vpop.f32.mrb[0].mxu0
    %v261 = vpop.f32.mrb[0].mxu0
    %v262 = vadd.f32 0.0, %v261
    %v263 = vpop.f32.mrb[0].mxu0
    %264 = vdwg.mxu0
    %v265 = vld [vmem:[%s4] sm:$0x1]
    %v267 = vlaneseq
    %v268 = vshrl.u32 %v267, 7
    %v269 = vsub.s32 0, %v268
    %v270 = vrot.slane %v265, %v269
    %v272 = vmul.f32 %v203, %v270
    %v273 = vmul.f32 %v206, %v270
    %v274 = vmul.f32 %v211, %v270
    %v275 = vmul.f32 %v214, %v270
    %v276 = vmul.f32 %v219, %v270
    %v277 = vmul.f32 %v222, %v270
    %v278 = vmul.f32 %v227, %v270
    %v279 = vmul.f32 %v230, %v270
    %v280 = vmul.f32 %v235, %v270
    %v281 = vmul.f32 %v238, %v270
    %v282 = vmul.f32 %v243, %v270
    %v283 = vmul.f32 %v246, %v270
    %v284 = vmul.f32 %v251, %v270
    %v285 = vmul.f32 %v254, %v270
    %v286 = vmul.f32 %v259, %v270
    %v287 = vmul.f32 %v262, %v270
    %v288 = vld [vmem:[%s5] sm:$0x1]
    %v290 = vlaneseq
    %v291 = vshrl.u32 %v290, 7
    %v292 = vsub.s32 0, %v291
    %v293 = vrot.slane %v288, %v292
    %v295 = vadd.f32 %v272, %v293
    %v296 = vadd.f32 %v273, %v293
    %v297 = vadd.f32 %v274, %v293
    %v298 = vadd.f32 %v275, %v293
    %v299 = vadd.f32 %v276, %v293
    %v300 = vadd.f32 %v277, %v293
    %v301 = vadd.f32 %v278, %v293
    %v302 = vadd.f32 %v279, %v293
    %v303 = vadd.f32 %v280, %v293
    %v304 = vadd.f32 %v281, %v293
    %v305 = vadd.f32 %v282, %v293
    %v306 = vadd.f32 %v283, %v293
    %v307 = vadd.f32 %v284, %v293
    %v308 = vadd.f32 %v285, %v293
    %v309 = vadd.f32 %v286, %v293
    %v310 = vadd.f32 %v287, %v293
    %v311 = vmax.f32 %v295, 0.0
    %v312 = vmax.f32 %v296, 0.0
    %v313 = vmax.f32 %v297, 0.0
    %v314 = vmax.f32 %v298, 0.0
    %v315 = vmax.f32 %v299, 0.0
    %v316 = vmax.f32 %v300, 0.0
    %v317 = vmax.f32 %v301, 0.0
    %v318 = vmax.f32 %v302, 0.0
    %v319 = vmax.f32 %v303, 0.0
    %v320 = vmax.f32 %v304, 0.0
    %v321 = vmax.f32 %v305, 0.0
    %v322 = vmax.f32 %v306, 0.0
    %v323 = vmax.f32 %v307, 0.0
    %v324 = vmax.f32 %v308, 0.0
    %v325 = vmax.f32 %v309, 0.0
    %v326 = vmax.f32 %v310, 0.0
    %v327 = vpack.c.bf16 %v312, %v311
    %v328 = vpack.c.bf16 %v314, %v313
    %v329 = vpack.c.bf16 %v316, %v315
    %v330 = vpack.c.bf16 %v318, %v317
    %v331 = vpack.c.bf16 %v320, %v319
    %v332 = vpack.c.bf16 %v322, %v321
    %v333 = vpack.c.bf16 %v324, %v323
    %v334 = vpack.c.bf16 %v326, %v325
    %v335 = vld [vmem:[%s6] sm:$0xf]
    %v336 = vld [vmem:[%s6 + $0x4] sm:$0xf]
    %v337 = vld [vmem:[%s6 + $0x8] sm:$0xf]
    %v338 = vld [vmem:[%s6 + $0xc] sm:$0xf]
    %v339 = vld [vmem:[%s6 + $0x10] sm:$0xf]
    %v340 = vld [vmem:[%s6 + $0x14] sm:$0xf]
    %v341 = vld [vmem:[%s6 + $0x18] sm:$0xf]
    %v342 = vld [vmem:[%s6 + $0x1c] sm:$0xf]
    %v343 = vld [vmem:[%s6 + $0x20] sm:$0xf]
    %v344 = vld [vmem:[%s6 + $0x24] sm:$0xf]
    %v345 = vld [vmem:[%s6 + $0x28] sm:$0xf]
    %v346 = vld [vmem:[%s6 + $0x2c] sm:$0xf]
    %v347 = vld [vmem:[%s6 + $0x30] sm:$0xf]
    %v348 = vld [vmem:[%s6 + $0x34] sm:$0xf]
    %v349 = vld [vmem:[%s6 + $0x38] sm:$0xf]
    %v350 = vld [vmem:[%s6 + $0x3c] sm:$0xf]
    %v367 = vunpack.c.l.b16 %v335
    %v368 = vunpack.c.l.b16 %v336
    %v369 = vunpack.c.l.b16 %v337
    %v370 = vunpack.c.l.b16 %v338
    %v371 = vunpack.c.l.b16 %v339
    %v372 = vunpack.c.l.b16 %v340
    %v373 = vunpack.c.l.b16 %v341
    %v374 = vunpack.c.l.b16 %v342
    %v375 = vunpack.c.l.b16 %v343
    %v376 = vunpack.c.l.b16 %v344
    %v377 = vunpack.c.l.b16 %v345
    %v378 = vunpack.c.l.b16 %v346
    %v379 = vunpack.c.l.b16 %v347
    %v380 = vunpack.c.l.b16 %v348
    %v381 = vunpack.c.l.b16 %v349
    %v382 = vunpack.c.l.b16 %v350
    %v383 = vpack.c.b16 %v368, %v367
    %v384 = vpack.c.b16 %v370, %v369
    %v385 = vpack.c.b16 %v372, %v371
    %v386 = vpack.c.b16 %v374, %v373
    %v387 = vpack.c.b16 %v376, %v375
    %v388 = vpack.c.b16 %v378, %v377
    %v389 = vpack.c.b16 %v380, %v379
    %v390 = vpack.c.b16 %v382, %v381
    %399 = vmatprep.subr.bf16.mxu0 0
    %400 = vmatpush1.bf16.msra.mxu0 %v383
    %401 = vmatprep.subr.bf16.mxu0 0
    %402 = vmatpush1.bf16.msra.mxu0 %v384
    %403 = vmatprep.subr.bf16.mxu0 0
    %404 = vmatpush1.bf16.msra.mxu0 %v385
    %405 = vmatprep.subr.bf16.mxu0 0
    %406 = vmatpush1.bf16.msra.mxu0 %v386
    %407 = vmatprep.subr.bf16.mxu0 0
    %408 = vmatpush1.bf16.msra.mxu0 %v387
    %409 = vmatprep.subr.bf16.mxu0 0
    %410 = vmatpush1.bf16.msra.mxu0 %v388
    %411 = vmatprep.subr.bf16.mxu0 0
    %412 = vmatpush1.bf16.msra.mxu0 %v389
    %413 = vmatprep.subr.bf16.mxu0 0
    %414 = vmatpush1.bf16.msra.mxu0 %v390
    %415 = vmatprep.subr.bf16.mxu0 0
    %416 = vmatpush1.bf16.msra.mxu0 0
    %417 = vmatprep.subr.bf16.mxu0 0
    %418 = vmatpush1.bf16.msra.mxu0 0
    %419 = vmatprep.subr.bf16.mxu0 0
    %420 = vmatpush1.bf16.msra.mxu0 0
    %421 = vmatprep.subr.bf16.mxu0 0
    %422 = vmatpush1.bf16.msra.mxu0 0
    %423 = vmatprep.subr.bf16.mxu0 0
    %424 = vmatpush1.bf16.msra.mxu0 0
    %425 = vmatprep.subr.bf16.mxu0 0
    %426 = vmatpush1.bf16.msra.mxu0 0
    %427 = vmatprep.subr.bf16.mxu0 0
    %428 = vmatpush1.bf16.msra.mxu0 0
    %429 = vmatprep.subr.bf16.mxu0 0
    %430 = vmatpush1.bf16.msra.mxu0 0
    %431 = vmatprep.mubr.bf16.mxu0 0
    %432 = vmatmul.mubr.bf16.gmra.mrb[0].mxu0 %v327
    %v433 = vpop.f32.mrb[0].mxu0
    %v434 = vadd.f32 0.0, %v433
    %v435 = vpop.f32.mrb[0].mxu0
    %v436 = vpop.f32.mrb[0].mxu0
    %v437 = vadd.f32 0.0, %v436
    %v438 = vpop.f32.mrb[0].mxu0
    %439 = vmatprep.mubr.bf16.mxu0 0
    %440 = vmatmul.mubr.bf16.gmra.mrb[0].mxu0 %v328
    %v441 = vpop.f32.mrb[0].mxu0
    %v442 = vadd.f32 0.0, %v441
    %v443 = vpop.f32.mrb[0].mxu0
    %v444 = vpop.f32.mrb[0].mxu0
    %v445 = vadd.f32 0.0, %v444
    %v446 = vpop.f32.mrb[0].mxu0
    %447 = vmatprep.mubr.bf16.mxu0 0
    %448 = vmatmul.mubr.bf16.gmra.mrb[0].mxu0 %v329
    %v449 = vpop.f32.mrb[0].mxu0
    %v450 = vadd.f32 0.0, %v449
    %v451 = vpop.f32.mrb[0].mxu0
    %v452 = vpop.f32.mrb[0].mxu0
    %v453 = vadd.f32 0.0, %v452
    %v454 = vpop.f32.mrb[0].mxu0
    %455 = vmatprep.mubr.bf16.mxu0 0
    %456 = vmatmul.mubr.bf16.gmra.mrb[0].mxu0 %v330
    %v457 = vpop.f32.mrb[0].mxu0
    %v458 = vadd.f32 0.0, %v457
    %v459 = vpop.f32.mrb[0].mxu0
    %v460 = vpop.f32.mrb[0].mxu0
    %v461 = vadd.f32 0.0, %v460
    %v462 = vpop.f32.mrb[0].mxu0
    %463 = vmatprep.mubr.bf16.mxu0 0
    %464 = vmatmul.mubr.bf16.gmra.mrb[0].mxu0 %v331
    %v465 = vpop.f32.mrb[0].mxu0
    %v466 = vadd.f32 0.0, %v465
    %v467 = vpop.f32.mrb[0].mxu0
    %v468 = vpop.f32.mrb[0].mxu0
    %v469 = vadd.f32 0.0, %v468
    %v470 = vpop.f32.mrb[0].mxu0
    %471 = vmatprep.mubr.bf16.mxu0 0
    %472 = vmatmul.mubr.bf16.gmra.mrb[0].mxu0 %v332
    %v473 = vpop.f32.mrb[0].mxu0
    %v474 = vadd.f32 0.0, %v473
    %v475 = vpop.f32.mrb[0].mxu0
    %v476 = vpop.f32.mrb[0].mxu0
    %v477 = vadd.f32 0.0, %v476
    %v478 = vpop.f32.mrb[0].mxu0
    %479 = vmatprep.mubr.bf16.mxu0 0
    %480 = vmatmul.mubr.bf16.gmra.mrb[0].mxu0 %v333
    %v481 = vpop.f32.mrb[0].mxu0
    %v482 = vadd.f32 0.0, %v481
    %v483 = vpop.f32.mrb[0].mxu0
    %v484 = vpop.f32.mrb[0].mxu0
    %v485 = vadd.f32 0.0, %v484
    %v486 = vpop.f32.mrb[0].mxu0
    %487 = vmatprep.mubr.bf16.mxu0 0
    %488 = vmatmul.mubr.bf16.gmra.mrb[0].mxu0 %v334
    %v489 = vpop.f32.mrb[0].mxu0
    %v490 = vadd.f32 0.0, %v489
    %v491 = vpop.f32.mrb[0].mxu0
    %v492 = vpop.f32.mrb[0].mxu0
    %v493 = vadd.f32 0.0, %v492
    %v494 = vpop.f32.mrb[0].mxu0
    %495 = vdwg.mxu0
    %v496 = vld [vmem:[%s7] sm:$0x1]
    %v498 = vlaneseq
    %v499 = vshrl.u32 %v498, 7
    %v500 = vsub.s32 0, %v499
    %v501 = vrot.slane %v496, %v500
    %v503 = vmul.f32 %v434, %v501
    %v504 = vmul.f32 %v437, %v501
    %v505 = vmul.f32 %v442, %v501
    %v506 = vmul.f32 %v445, %v501
    %v507 = vmul.f32 %v450, %v501
    %v508 = vmul.f32 %v453, %v501
    %v509 = vmul.f32 %v458, %v501
    %v510 = vmul.f32 %v461, %v501
    %v511 = vmul.f32 %v466, %v501
    %v512 = vmul.f32 %v469, %v501
    %v513 = vmul.f32 %v474, %v501
    %v514 = vmul.f32 %v477, %v501
    %v515 = vmul.f32 %v482, %v501
    %v516 = vmul.f32 %v485, %v501
    %v517 = vmul.f32 %v490, %v501
    %v518 = vmul.f32 %v493, %v501
    %v519 = vld [vmem:[%s8] sm:$0x1]
    %v521 = vlaneseq
    %v522 = vshrl.u32 %v521, 7
    %v523 = vsub.s32 0, %v522
    %v524 = vrot.slane %v519, %v523
    %v526 = vadd.f32 %v503, %v524
    %v527 = vadd.f32 %v504, %v524
    %v528 = vadd.f32 %v505, %v524
    %v529 = vadd.f32 %v506, %v524
    %v530 = vadd.f32 %v507, %v524
    %v531 = vadd.f32 %v508, %v524
    %v532 = vadd.f32 %v509, %v524
    %v533 = vadd.f32 %v510, %v524
    %v534 = vadd.f32 %v511, %v524
    %v535 = vadd.f32 %v512, %v524
    %v536 = vadd.f32 %v513, %v524
    %v537 = vadd.f32 %v514, %v524
    %v538 = vadd.f32 %v515, %v524
    %v539 = vadd.f32 %v516, %v524
    %v540 = vadd.f32 %v517, %v524
    %v541 = vadd.f32 %v518, %v524
    %v542 = vmax.f32 %v526, 0.0
    %v543 = vmax.f32 %v527, 0.0
    %v544 = vmax.f32 %v528, 0.0
    %v545 = vmax.f32 %v529, 0.0
    %v546 = vmax.f32 %v530, 0.0
    %v547 = vmax.f32 %v531, 0.0
    %v548 = vmax.f32 %v532, 0.0
    %v549 = vmax.f32 %v533, 0.0
    %v550 = vmax.f32 %v534, 0.0
    %v551 = vmax.f32 %v535, 0.0
    %v552 = vmax.f32 %v536, 0.0
    %v553 = vmax.f32 %v537, 0.0
    %v554 = vmax.f32 %v538, 0.0
    %v555 = vmax.f32 %v539, 0.0
    %v556 = vmax.f32 %v540, 0.0
    %v557 = vmax.f32 %v541, 0.0
    %v558 = vld [vmem:[%s9] sm:$0x1]
    %v560 = vlaneseq
    %v561 = vshrl.u32 %v560, 7
    %v562 = vsub.s32 0, %v561
    %v563 = vrot.slane %v558, %v562
    %v565 = vmul.f32 %v542, %v563
    %v566 = vmul.f32 %v543, %v563
    %v567 = vmul.f32 %v544, %v563
    %v568 = vmul.f32 %v545, %v563
    %v569 = vmul.f32 %v546, %v563
    %v570 = vmul.f32 %v547, %v563
    %v571 = vmul.f32 %v548, %v563
    %v572 = vmul.f32 %v549, %v563
    %v573 = vmul.f32 %v550, %v563
    %v574 = vmul.f32 %v551, %v563
    %v575 = vmul.f32 %v552, %v563
    %v576 = vmul.f32 %v553, %v563
    %v577 = vmul.f32 %v554, %v563
    %v578 = vmul.f32 %v555, %v563
    %v579 = vmul.f32 %v556, %v563
    %v580 = vmul.f32 %v557, %v563
    %581 = vadd.xlane.f32.xlu0 %v565
    %v582 = vpop.xlane.xlu0 %581
    %583 = vadd.xlane.f32.xlu0 %v566
    %v584 = vpop.xlane.xlu0 %583
    %585 = vadd.xlane.f32.xlu0 %v567
    %v586 = vpop.xlane.xlu0 %585
    %587 = vadd.xlane.f32.xlu0 %v568
    %v588 = vpop.xlane.xlu0 %587
    %589 = vadd.xlane.f32.xlu0 %v569
    %v590 = vpop.xlane.xlu0 %589
    %591 = vadd.xlane.f32.xlu0 %v570
    %v592 = vpop.xlane.xlu0 %591
    %593 = vadd.xlane.f32.xlu0 %v571
    %v594 = vpop.xlane.xlu0 %593
    %595 = vadd.xlane.f32.xlu0 %v572
    %v596 = vpop.xlane.xlu0 %595
    %597 = vadd.xlane.f32.xlu0 %v573
    %v598 = vpop.xlane.xlu0 %597
    %599 = vadd.xlane.f32.xlu0 %v574
    %v600 = vpop.xlane.xlu0 %599
    %601 = vadd.xlane.f32.xlu0 %v575
    %v602 = vpop.xlane.xlu0 %601
    %603 = vadd.xlane.f32.xlu0 %v576
    %v604 = vpop.xlane.xlu0 %603
    %605 = vadd.xlane.f32.xlu0 %v577
    %v606 = vpop.xlane.xlu0 %605
    %607 = vadd.xlane.f32.xlu0 %v578
    %v608 = vpop.xlane.xlu0 %607
    %609 = vadd.xlane.f32.xlu0 %v579
    %v610 = vpop.xlane.xlu0 %609
    %611 = vadd.xlane.f32.xlu0 %v580
    %v612 = vpop.xlane.xlu0 %611
    %s613 = sld [smem:[#allocation2]]
    %v614 = vstv %s613
    %v615 = vadd.f32 %v582, %v614
    %v616 = vadd.f32 %v584, %v614
    %v617 = vadd.f32 %v586, %v614
    %v618 = vadd.f32 %v588, %v614
    %v619 = vadd.f32 %v590, %v614
    %v620 = vadd.f32 %v592, %v614
    %v621 = vadd.f32 %v594, %v614
    %v622 = vadd.f32 %v596, %v614
    %v623 = vadd.f32 %v598, %v614
    %v624 = vadd.f32 %v600, %v614
    %v625 = vadd.f32 %v602, %v614
    %v626 = vadd.f32 %v604, %v614
    %v627 = vadd.f32 %v606, %v614
    %v628 = vadd.f32 %v608, %v614
    %v629 = vadd.f32 %v610, %v614
    %v630 = vadd.f32 %v612, %v614
    %v647 = vlaneseq
    %v648 = vand.u32 %v647, 127
    %v649 = vlaneseq
    %v650 = vshrl.u32 %v649, 7
    %v651 = vsub.s32 %v648, %v650
    %v652 = vrot.slane %v615, %v651
    %v653 = vadd.s32 %v648, 4294967288
    %v654 = vlaneseq
    %v655 = vshrl.u32 %v654, 7
    %v656 = vsub.s32 %v653, %v655
    %v657 = vrot.slane %v616, %v656
    %vm658 = vcmask 130112
    %v659 = vsel %vm658, %v657, %v652
    %v660 = vadd.s32 %v648, 4294967280
    %v661 = vlaneseq
    %v662 = vshrl.u32 %v661, 7
    %v663 = vsub.s32 %v660, %v662
    %v664 = vrot.slane %v617, %v663
    %vm665 = vcmask 195712
    %v666 = vsel %vm665, %v664, %v659
    %v667 = vadd.s32 %v648, 4294967272
    %v668 = vlaneseq
    %v669 = vshrl.u32 %v668, 7
    %v670 = vsub.s32 %v667, %v669
    %v671 = vrot.slane %v618, %v670
    %vm672 = vcmask 261312
    %v673 = vsel %vm672, %v671, %v666
    %v674 = vadd.s32 %v648, 4294967264
    %v675 = vlaneseq
    %v676 = vshrl.u32 %v675, 7
    %v677 = vsub.s32 %v674, %v676
    %v678 = vrot.slane %v619, %v677
    %vm679 = vcmask 326912
    %v680 = vsel %vm679, %v678, %v673
    %v681 = vadd.s32 %v648, 4294967256
    %v682 = vlaneseq
    %v683 = vshrl.u32 %v682, 7
    %v684 = vsub.s32 %v681, %v683
    %v685 = vrot.slane %v620, %v684
    %vm686 = vcmask 392512
    %v687 = vsel %vm686, %v685, %v680
    %v688 = vadd.s32 %v648, 4294967248
    %v689 = vlaneseq
    %v690 = vshrl.u32 %v689, 7
    %v691 = vsub.s32 %v688, %v690
    %v692 = vrot.slane %v621, %v691
    %vm693 = vcmask 458112
    %v694 = vsel %vm693, %v692, %v687
    %v695 = vadd.s32 %v648, 4294967240
    %v696 = vlaneseq
    %v697 = vshrl.u32 %v696, 7
    %v698 = vsub.s32 %v695, %v697
    %v699 = vrot.slane %v622, %v698
    %vm700 = vcmask 523712
    %v701 = vsel %vm700, %v699, %v694
    %v702 = vadd.s32 %v648, 4294967232
    %v703 = vlaneseq
    %v704 = vshrl.u32 %v703, 7
    %v705 = vsub.s32 %v702, %v704
    %v706 = vrot.slane %v623, %v705
    %vm707 = vcmask 589312
    %v708 = vsel %vm707, %v706, %v701
    %v709 = vadd.s32 %v648, 4294967224
    %v710 = vlaneseq
    %v711 = vshrl.u32 %v710, 7
    %v712 = vsub.s32 %v709, %v711
    %v713 = vrot.slane %v624, %v712
    %vm714 = vcmask 654912
    %v715 = vsel %vm714, %v713, %v708
    %v716 = vadd.s32 %v648, 4294967216
    %v717 = vlaneseq
    %v718 = vshrl.u32 %v717, 7
    %v719 = vsub.s32 %v716, %v718
    %v720 = vrot.slane %v625, %v719
    %vm721 = vcmask 720512
    %v722 = vsel %vm721, %v720, %v715
    %v723 = vadd.s32 %v648, 4294967208
    %v724 = vlaneseq
    %v725 = vshrl.u32 %v724, 7
    %v726 = vsub.s32 %v723, %v725
    %v727 = vrot.slane %v626, %v726
    %vm728 = vcmask 786112
    %v729 = vsel %vm728, %v727, %v722
    %v730 = vadd.s32 %v648, 4294967200
    %v731 = vlaneseq
    %v732 = vshrl.u32 %v731, 7
    %v733 = vsub.s32 %v730, %v732
    %v734 = vrot.slane %v627, %v733
    %vm735 = vcmask 851712
    %v736 = vsel %vm735, %v734, %v729
    %v737 = vadd.s32 %v648, 4294967192
    %v738 = vlaneseq
    %v739 = vshrl.u32 %v738, 7
    %v740 = vsub.s32 %v737, %v739
    %v741 = vrot.slane %v628, %v740
    %vm742 = vcmask 917312
    %v743 = vsel %vm742, %v741, %v736
    %v744 = vadd.s32 %v648, 4294967184
    %v745 = vlaneseq
    %v746 = vshrl.u32 %v745, 7
    %v747 = vsub.s32 %v744, %v746
    %v748 = vrot.slane %v629, %v747
    %vm749 = vcmask 982912
    %v750 = vsel %vm749, %v748, %v743
    %v751 = vadd.s32 %v648, 4294967176
    %v752 = vlaneseq
    %v753 = vshrl.u32 %v752, 7
    %v754 = vsub.s32 %v751, %v753
    %v755 = vrot.slane %v630, %v754
    %vm756 = vcmask 1048512
    %v757 = vsel %vm756, %v755, %v750
    %759 = vst [vmem:[#allocation3] sm:$0x1] %v757
    // Predicated region
    $region42: #{tpu_custom_call.1} parent=1 // pred_check
      _
    $region43: #{tpu_custom_call.1} parent=1 // pred_check_branch
      %761 = sbr.rel (0) target = $region45
    $region44: #{tpu_custom_call.1} parent=1 // pred_region
      %s763 = ssub.s32 16, 16
      %764 = vsyncadd [#allocation4], %s763
      %s766 = sshll.u32 [#allocation3], 4
      %s767 = int_to_ptr.vmem [resolvable:$true] %s766
      %769 = dma.vmem_to_hbm [thread:$0]  %s767, 16, %s10, [#allocation4]
    $region45: #{tpu_custom_call.1} parent=1 // pred_fallthru
      _
    // Predicated region
    $region46: #{tpu_custom_call.1} parent=1 // pred_check
      _
    $region47: #{tpu_custom_call.1} parent=1 // pred_check_branch
      %771 = sbr.rel (0) target = $region49
    $region48: #{tpu_custom_call.1} parent=1 // pred_region
      %772 = dma.done [#allocation4], 16
    $region49: #{tpu_custom_call.1} parent=1 // pred_fallthru
      _
    %773 = vsyncpa [#allocation4], 1

</llo_original>
